<compile_context>
chip_gen: v5e
topology: v5e:2x2
jax: 0.10.0
libtpu: 0.0.40
codegen_flags: <defaults>
</compile_context>

<pallas_src>
import functools

import jax
import jax.numpy as jnp
from jax import lax
from jax.experimental import pallas as pl
from jax.experimental.pallas import tpu as pltpu


# ---------------------------------------------------------------------------
# VMEM budgeting (portable across v5e / v6e / v7x)
# ---------------------------------------------------------------------------
def _vmem_limits():
    """(physical vmem capacity, scoped vmem limit to request)."""
    try:
        cap = int(pltpu.get_tpu_info().vmem_capacity_bytes)
    except Exception:
        cap = 64 << 20  # conservative fallback (v7x per-core size)
    vmem_limit = min(cap // 2, 64 << 20)  # ~32 MiB on v7x, 64 MiB on v5e/v6e
    return cap, vmem_limit


def _pick_block_rows(rows, d, h_tile, x_itemsize, o_itemsize, w_itemsize,
                     *, pipeline_budget_bytes, max_rows=1024):
    """Largest row tile that fits the pipeline-buffer budget.

    Accounts for double-buffered x/out tiles, the f32 intermediates created in
    the kernel, the y scratch, and the (double-buffered) resident constants.
    Rounds to the sublane-packing multiple and keeps >=4 row tiles for big
    inputs so the pipeline has something to prefetch on both v7x TensorCores.
    """
    row_align = max(8, 32 // max(x_itemsize, 1))  # 8 f32, 16 bf16, 32 int8/fp8

    # Resident constants (gamma, beta in f32, bias tile in f32, W tile), assume
    # double-buffered since we do not force Buffered(1).
    const_bytes = 2 * (d * h_tile * w_itemsize + 2 * d * 4 + h_tile * 4)
    budget = max(pipeline_budget_bytes - const_bytes, 1 << 20)

    per_row = (2 * d * x_itemsize            # x tile, double-buffered
               + 2 * h_tile * o_itemsize     # out tile, double-buffered
               + (2 * d + h_tile) * 4        # in-kernel f32 temps
               + d * w_itemsize)             # y scratch (matmul dtype)

    cand = budget // max(per_row, 1)
    cand = min(cand, max_rows, rows)
    if rows >= 4 * row_align:
        cand = min(cand, max(rows // 4, row_align))  # >=4 row tiles when big
    cand = max(row_align, (cand // row_align) * row_align)
    return int(cand)


def _pick_h_tile(h, *, h_tile=None, max_h_tile=512):
    if h_tile is not None:
        return int(h_tile)
    if h <= max_h_tile:
        return int(h)
    return int(max_h_tile)  # multiple of 128 -> lane-dense, ragged tail masked


# ---------------------------------------------------------------------------
# Kernel 1: fused LayerNorm + Linear (the typical STAM PreNorm(fn=Linear) case)
# ---------------------------------------------------------------------------
def _prenorm_linear_kernel(x_ref, g_ref, b_ref, w_ref, bias_ref, o_ref, y_ref,
                           *, eps):
    # x_ref: (bm, D)   g/b: (1, D) f32   w: (D, tn)   bias: (1, tn) f32
    # o_ref: (bm, tn)  y_ref: (bm, D) scratch in w.dtype (persists across j).
    @pl.when(pl.program_id(1) == 0)
    def _compute_layernorm():
        x = x_ref[...].astype(jnp.float32)
        inv_d = jnp.float32(1.0 / x.shape[-1])
        s1 = jnp.sum(x, axis=-1, keepdims=True)
        s2 = jnp.sum(x * x, axis=-1, keepdims=True)
        mean = s1 * inv_d
        var = jnp.maximum(s2 * inv_d - mean * mean, 0.0)  # biased, like torch
        inv = lax.rsqrt(var + eps)
        y = (x - mean) * inv * g_ref[...] + b_ref[...]
        y_ref[...] = y.astype(y_ref.dtype)

    out = jnp.dot(y_ref[...], w_ref[...], preferred_element_type=jnp.float32)
    o_ref[...] = (out + bias_ref[...]).astype(o_ref.dtype)


def pre_norm_linear_pallas(x, gamma, beta, w, bias, *, eps=1e-5,
                           out_dtype=None, block_rows=None, h_tile=None):
    """Fused PreNorm with fn = Linear(D -> H).  x: (B, N, D) -> (B, N, H)."""
    B, N, D = x.shape
    Dw, H = w.shape
    assert Dw == D
    out_dtype = out_dtype or x.dtype

    rows = B * N
    x2d = x.reshape(rows, D)

    tn = _pick_h_tile(H, h_tile=h_tile)
    _, vmem_limit = _vmem_limits()
    if block_rows is None:
        block_rows = _pick_block_rows(
            rows, D, tn,
            jnp.dtype(x.dtype).itemsize, jnp.dtype(out_dtype).itemsize,
            jnp.dtype(w.dtype).itemsize,
            pipeline_budget_bytes=vmem_limit // 2)

    # Hoisted, one-time casts (resident blocks are not re-DMA'd per grid step).
    gamma_f32 = gamma.reshape(1, D).astype(jnp.float32)
    beta_f32 = beta.reshape(1, D).astype(jnp.float32)
    bias_f32 = bias.reshape(1, H).astype(jnp.float32)

    grid = (pl.cdiv(rows, block_rows), pl.cdiv(H, tn))

    out = pl.pallas_call(
        functools.partial(_prenorm_linear_kernel, eps=eps),
        out_shape=jax.ShapeDtypeStruct((rows, H), out_dtype),
        grid_spec=pltpu.PrefetchScalarGridSpec(
            num_scalar_prefetch=0,
            grid=grid,
            in_specs=[
                pl.BlockSpec((block_rows, D), lambda i, j: (i, 0)),
                pl.BlockSpec((1, D), lambda i, j: (0, 0)),
                pl.BlockSpec((1, D), lambda i, j: (0, 0)),
                pl.BlockSpec((D, tn), lambda i, j: (0, j)),
                pl.BlockSpec((1, tn), lambda i, j: (0, j)),
            ],
            out_specs=pl.BlockSpec((block_rows, tn), lambda i, j: (i, j)),
            scratch_shapes=[pltpu.VMEM((block_rows, D), w.dtype)],
        ),
        compiler_params=pltpu.CompilerParams(
            dimension_semantics=("parallel", "arbitrary"),
            vmem_limit_bytes=vmem_limit,
        ),
    )(x2d, gamma_f32, beta_f32, w, bias_f32)

    return out.reshape(B, N, H)


# ---------------------------------------------------------------------------
# Kernel 2: standalone LayerNorm (general path for arbitrary wrapped `fn`)
# ---------------------------------------------------------------------------
def _layernorm_kernel(x_ref, g_ref, b_ref, o_ref, *, eps):
    x = x_ref[...].astype(jnp.float32)
    inv_d = jnp.float32(1.0 / x.shape[-1])
    s1 = jnp.sum(x, axis=-1, keepdims=True)
    s2 = jnp.sum(x * x, axis=-1, keepdims=True)
    mean = s1 * inv_d
    var = jnp.maximum(s2 * inv_d - mean * mean, 0.0)
    inv = lax.rsqrt(var + eps)
    o_ref[...] = ((x - mean) * inv * g_ref[...] + b_ref[...]).astype(o_ref.dtype)


def layer_norm_pallas(x2d, gamma, beta, *, eps=1e-5, block_rows=None,
                      out_dtype=None):
    rows, dim = x2d.shape
    out_dtype = out_dtype or x2d.dtype  # can be bf16 to halve the writeback
    _, vmem_limit = _vmem_limits()
    if block_rows is None:
        block_rows = _pick_block_rows(
            rows, dim, dim,
            jnp.dtype(x2d.dtype).itemsize, jnp.dtype(out_dtype).itemsize, 0,
            pipeline_budget_bytes=vmem_limit // 2)

    gamma_f32 = gamma.reshape(1, dim).astype(jnp.float32)
    beta_f32 = beta.reshape(1, dim).astype(jnp.float32)
    grid = (pl.cdiv(rows, block_rows),)

    return pl.pallas_call(
        functools.partial(_layernorm_kernel, eps=eps),
        out_shape=jax.ShapeDtypeStruct((rows, dim), out_dtype),
        grid_spec=pltpu.PrefetchScalarGridSpec(
            num_scalar_prefetch=0,
            grid=grid,
            in_specs=[
                pl.BlockSpec((block_rows, dim), lambda i: (i, 0)),
                pl.BlockSpec((1, dim), lambda i: (0, 0)),
                pl.BlockSpec((1, dim), lambda i: (0, 0)),
            ],
            out_specs=pl.BlockSpec((block_rows, dim), lambda i: (i, 0)),
        ),
        compiler_params=pltpu.CompilerParams(
            dimension_semantics=("parallel",),
            vmem_limit_bytes=vmem_limit,
        ),
    )(x2d, gamma_f32, beta_f32)


def pre_norm(x, gamma, beta, fn, *, eps=1e-5, norm_dtype=None):
    """General PreNorm.forward: fn(LayerNorm(x)) for arbitrary fn.  x: (B, N, D).

    Prefer pre_norm_linear_pallas whenever fn begins with a Linear matmul.
    """
    B, N, D = x.shape
    normed = layer_norm_pallas(x.reshape(B * N, D), gamma, beta, eps=eps,
                               out_dtype=norm_dtype)
    return fn(normed.reshape(B, N, D))


# ---------------------------------------------------------------------------
# Demo / correctness checks
# ---------------------------------------------------------------------------
if __name__ == "__main__":
    eps = 1e-5
    key = jax.random.PRNGKey(0)
    kx, kg, kb, kw, kbias, kx2, kw2, kb2 = jax.random.split(key, 8)

    def ln_ref(x, g, b):
        mu = jnp.mean(x, axis=-1, keepdims=True)
        var = jnp.mean((x - mu) ** 2, axis=-1, keepdims=True)
        return (x - mu) / jnp.sqrt(var + eps) * g + b

    # ---- Test 1: fused PreNorm(fn=Linear), lane-dense D=H=128. ----
    B, N, D, H = 2, 8, 128, 128
    x = jax.random.normal(kx, (B, N, D), jnp.float32)
    gamma = 1.0 + 0.01 * jax.random.normal(kg, (D,), jnp.float32)
    beta = 0.01 * jax.random.normal(kb, (D,), jnp.float32)
    w = jax.random.normal(kw, (D, H), jnp.float32) / jnp.sqrt(D)
    bias = 0.01 * jax.random.normal(kbias, (H,), jnp.float32)

    fn = lambda y: jnp.einsum("bnd,dh->bnh", y, w) + bias
    ref1 = fn(ln_ref(x, gamma, beta))

    out1 = jax.block_until_ready(
        pre_norm_linear_pallas(x, gamma, beta, w, bias, eps=eps))
    assert out1.shape == (B, N, H)
    assert jnp.allclose(out1, ref1, atol=1e-4, rtol=1e-4)

    # ---- Test 2: ragged last row block (rows=18 not multiple of tile) and
    #      H tiling (h_tile=128 over H=256 exercises scratch reuse at j>0). ----
    B2, N2, D2, H2 = 2, 9, 128, 256
    x2 = jax.random.normal(kx2, (B2, N2, D2), jnp.float32)
    w2 = jax.random.normal(kw2, (D2, H2), jnp.float32) / jnp.sqrt(D2)
    bias2 = 0.01 * jax.random.normal(kb2, (H2,), jnp.float32)
    ref2 = jnp.einsum("bnd,dh->bnh", ln_ref(x2, gamma, beta), w2) + bias2
    out2 = jax.block_until_ready(
        pre_norm_linear_pallas(x2, gamma, beta, w2, bias2, eps=eps, h_tile=128))
    assert out2.shape == (B2, N2, H2)
    assert jnp.allclose(out2, ref2, atol=1e-4, rtol=1e-4)

    # ---- Test 3: general PreNorm path (arbitrary fn applied outside kernel). ----
    out3 = jax.block_until_ready(pre_norm(x, gamma, beta, fn, eps=eps))
    assert jnp.allclose(out3, ref1, atol=1e-4, rtol=1e-4)

    print("KERNEL_OK")
</pallas_src>

<mosaic_0001>
module attributes {stable_mosaic.version = 11 : i64} {
  func.func @_prenorm_linear_kernel(%arg0: i32, %arg1: i32, %arg2: memref<16x128xf32, #tpu.memory_space<vmem>>, %arg3: memref<1x128xf32, #tpu.memory_space<vmem>>, %arg4: memref<1x128xf32, #tpu.memory_space<vmem>>, %arg5: memref<128x128xf32, #tpu.memory_space<vmem>>, %arg6: memref<1x128xf32, #tpu.memory_space<vmem>>, %arg7: memref<16x128xf32, #tpu.memory_space<vmem>>, %arg8: memref<16x128xf32, #tpu.memory_space<vmem>>) attributes {dimension_semantics = [#tpu.dimension_semantics<parallel>, #tpu.dimension_semantics<arbitrary>], iteration_bounds = array<i64: 1, 1>, scalar_prefetch = 0 : i64, scratch_operands = 1 : i64, tpu.core_type = #tpu.core_type<tc>, window_params = [{transform_indices = @transform_0, window_bounds = array<i64: 16, 128>}, {pipeline_mode = #tpu.pipeline_mode<synchronous>, transform_indices = @transform_1, window_bounds = array<i64: 1, 128>}, {pipeline_mode = #tpu.pipeline_mode<synchronous>, transform_indices = @transform_2, window_bounds = array<i64: 1, 128>}, {transform_indices = @transform_3, window_bounds = array<i64: 128, 128>}, {transform_indices = @transform_4, window_bounds = array<i64: 1, 128>}, {transform_indices = @transform_5, window_bounds = array<i64: 16, 128>}]} {
    %c0_i32 = arith.constant 0 : i32
    %0 = arith.cmpi eq, %arg1, %c0_i32 : i32
    %1 = arith.extui %0 : i1 to i32
    %c0_i32_0 = arith.constant 0 : i32
    %2 = arith.cmpi ne, %1, %c0_i32_0 : i32
    scf.if %2 {
      %c0_8 = arith.constant 0 : index
      %c0_9 = arith.constant 0 : index
      %10 = vector.load %arg2[%c0_8, %c0_9] : memref<16x128xf32, #tpu.memory_space<vmem>>, vector<16x128xf32>
      %cst_10 = arith.constant dense<0.000000e+00> : vector<16xf32>
      %11 = vector.multi_reduction <add>, %10, %cst_10 [1] : vector<16x128xf32> to vector<16xf32>
      %12 = vector.shape_cast %11 : vector<16xf32> to vector<16x1xf32>
      %13 = arith.mulf %10, %10 : vector<16x128xf32>
      %cst_11 = arith.constant dense<0.000000e+00> : vector<16xf32>
      %14 = vector.multi_reduction <add>, %13, %cst_11 [1] : vector<16x128xf32> to vector<16xf32>
      %15 = vector.shape_cast %14 : vector<16xf32> to vector<16x1xf32>
      %cst_12 = arith.constant 7.812500e-03 : f32
      %16 = vector.broadcast %cst_12 : f32 to vector<16x1xf32>
      %17 = arith.mulf %12, %16 : vector<16x1xf32>
      %cst_13 = arith.constant 7.812500e-03 : f32
      %18 = vector.broadcast %cst_13 : f32 to vector<16x1xf32>
      %19 = arith.mulf %15, %18 : vector<16x1xf32>
      %20 = arith.mulf %17, %17 : vector<16x1xf32>
      %21 = arith.subf %19, %20 : vector<16x1xf32>
      %cst_14 = arith.constant 0.000000e+00 : f32
      %22 = vector.broadcast %cst_14 : f32 to vector<16x1xf32>
      %23 = arith.maximumf %21, %22 : vector<16x1xf32>
      %cst_15 = arith.constant 9.99999974E-6 : f32
      %24 = vector.broadcast %cst_15 : f32 to vector<16x1xf32>
      %25 = arith.addf %23, %24 : vector<16x1xf32>
      %26 = math.rsqrt %25 : vector<16x1xf32>
      %27 = vector.broadcast %17 : vector<16x1xf32> to vector<16x128xf32>
      %28 = arith.subf %10, %27 : vector<16x128xf32>
      %29 = vector.broadcast %26 : vector<16x1xf32> to vector<16x128xf32>
      %30 = arith.mulf %28, %29 : vector<16x128xf32>
      %c0_16 = arith.constant 0 : index
      %c0_17 = arith.constant 0 : index
      %31 = vector.load %arg3[%c0_16, %c0_17] : memref<1x128xf32, #tpu.memory_space<vmem>>, vector<1x128xf32>
      %32 = vector.broadcast %31 : vector<1x128xf32> to vector<16x128xf32>
      %33 = arith.mulf %30, %32 : vector<16x128xf32>
      %c0_18 = arith.constant 0 : index
      %c0_19 = arith.constant 0 : index
      %34 = vector.load %arg4[%c0_18, %c0_19] : memref<1x128xf32, #tpu.memory_space<vmem>>, vector<1x128xf32>
      %35 = vector.broadcast %34 : vector<1x128xf32> to vector<16x128xf32>
      %36 = arith.addf %33, %35 : vector<16x128xf32>
      %c0_20 = arith.constant 0 : index
      %c0_21 = arith.constant 0 : index
      %37 = vector.load %arg8[%c0_20, %c0_21] : memref<16x128xf32, #tpu.memory_space<vmem>>, vector<16x128xf32>
      tpu.vector_store %arg8[%c0_20, %c0_21], %36 {strides = array<i32>} : memref<16x128xf32, #tpu.memory_space<vmem>>, vector<16x128xf32>,
    } else {
    }
    %c0 = arith.constant 0 : index
    %c0_1 = arith.constant 0 : index
    %3 = vector.load %arg8[%c0, %c0_1] : memref<16x128xf32, #tpu.memory_space<vmem>>, vector<16x128xf32>
    %c0_2 = arith.constant 0 : index
    %c0_3 = arith.constant 0 : index
    %4 = vector.load %arg5[%c0_2, %c0_3] : memref<128x128xf32, #tpu.memory_space<vmem>>, vector<128x128xf32>
    %cst = arith.constant dense<0.000000e+00> : vector<16x128xf32>
    %5 = tpu.matmul %3, %4, %cst {dimension_numbers = #tpu.dot_dimension_numbers<[1], [0], [0], [1], [0, 0, 1, 1], [], []>} : vector<16x128xf32>, vector<128x128xf32>, vector<16x128xf32> -> vector<16x128xf32>
    %c0_4 = arith.constant 0 : index
    %c0_5 = arith.constant 0 : index
    %6 = vector.load %arg6[%c0_4, %c0_5] : memref<1x128xf32, #tpu.memory_space<vmem>>, vector<1x128xf32>
    %7 = vector.broadcast %6 : vector<1x128xf32> to vector<16x128xf32>
    %8 = arith.addf %5, %7 : vector<16x128xf32>
    %c0_6 = arith.constant 0 : index
    %c0_7 = arith.constant 0 : index
    %9 = vector.load %arg7[%c0_6, %c0_7] : memref<16x128xf32, #tpu.memory_space<vmem>>, vector<16x128xf32>
    tpu.vector_store %arg7[%c0_6, %c0_7], %8 {strides = array<i32>} : memref<16x128xf32, #tpu.memory_space<vmem>>, vector<16x128xf32>,
    return
  }
  func.func @transform_0(%arg0: i32, %arg1: i32) -> (i32, i32) {
    %c0_i32 = arith.constant 0 : i32
    %c0_i32_0 = arith.constant 0 : i32
    return %arg0, %c0_i32 : i32, i32
  }
  func.func @transform_1(%arg0: i32, %arg1: i32) -> (i32, i32) {
    %c0_i32 = arith.constant 0 : i32
    %c0_i32_0 = arith.constant 0 : i32
    %c0_i32_1 = arith.constant 0 : i32
    return %c0_i32, %c0_i32_0 : i32, i32
  }
  func.func @transform_2(%arg0: i32, %arg1: i32) -> (i32, i32) {
    %c0_i32 = arith.constant 0 : i32
    %c0_i32_0 = arith.constant 0 : i32
    %c0_i32_1 = arith.constant 0 : i32
    return %c0_i32, %c0_i32_0 : i32, i32
  }
  func.func @transform_3(%arg0: i32, %arg1: i32) -> (i32, i32) {
    %c0_i32 = arith.constant 0 : i32
    %c0_i32_0 = arith.constant 0 : i32
    return %c0_i32, %arg1 : i32, i32
  }
  func.func @transform_4(%arg0: i32, %arg1: i32) -> (i32, i32) {
    %c0_i32 = arith.constant 0 : i32
    %c0_i32_0 = arith.constant 0 : i32
    return %c0_i32, %arg1 : i32, i32
  }
  func.func @transform_5(%arg0: i32, %arg1: i32) -> (i32, i32) {
    %c0_i32 = arith.constant 0 : i32
    return %arg0, %arg1 : i32, i32
  }
}

</mosaic_0001>

<llo_original>
// kernel: tpu_custom_call.1
$region0: #{tpu_custom_call.1}
  #allocation0 [shape = 'u32[]', space=smem, size = 0x4, offset = 0x4, fixed_abs, tag = 'smem constant byte address 0x4 - core index']
  #allocation1 [shape = 'u32[72,128]{1,0:T(1,128)}', space=vmem, size = 0x9000, scoped, tag = 'internal scratch']
  #allocation2 [shape = 'f32[16,128]{1,0:T(8,128)}', space=vmem, size = 0x2000, scoped, tag = 'scratch operand']
  %s0 = inlined_call_operand.hbm [shape: f32[16,128], index: 0, kind: input, shape index: {}]
  %s1 = inlined_call_operand.hbm [shape: f32[1,128], index: 1, kind: input, shape index: {}]
  %s2 = inlined_call_operand.vmem [shape: f32[1,128], index: 2, kind: input, shape index: {}]
  %s3 = inlined_call_operand.hbm [shape: f32[128,128], index: 3, kind: input, shape index: {}]
  %s4 = inlined_call_operand.vmem [shape: f32[1,128], index: 4, kind: input, shape index: {}]
  %s5 = inlined_call_operand.hbm [shape: f32[16,128], index: 5, kind: output, shape index: {}]
  %s6 = sld [smem:[#allocation0]]
  $region46: #{tpu_custom_call.1} parent=0
    _
  %s8 = ssub.s32 1, %s6
  %s9 = scalar_select 0, %s8, %s6
  $region1: #{tpu_custom_call.1} parent=0
    #allocation3 [shape = 'u8[8192]{0}', space=vmem, size = 0x2000, scoped, tag = 'input window, operand 0, single buffered']
    #allocation4 [shape = 's32[1]{0}', space=sflag, size = 0x4, scoped, tag = 'scoped memory for tpu_custom_call.1']
    #allocation5 [shape = 's32[1]{0}', space=sflag, size = 0x4, scoped, tag = 'scoped memory for tpu_custom_call.1']
    #allocation6 [shape = 'u8[512]{0}', space=vmem, size = 0x400, scoped, tag = 'input window, operand 1, single buffered']
    #allocation7 [shape = 's32[1]{0}', space=sflag, size = 0x4, scoped, tag = 'scoped memory for tpu_custom_call.1']
    #allocation8 [shape = 'u8[65536]{0}', space=vmem, size = 0x10000, scoped, tag = 'input window, operand 3, single buffered']
    #allocation9 [shape = 'u8[8192]{0}', space=vmem, size = 0x2000, scoped, tag = 'output window, operand 0, single buffered']
    %10 = vsyncpa [#allocation4], 0
    %11 = vsyncpa [#allocation7], 0
    %12 = vsyncpa [#allocation5], 0
    // Predicated region
    $region2: #{tpu_custom_call.1} parent=1 // pred_check
      _
    $region3: #{tpu_custom_call.1} parent=1 // pred_check_branch
      %14 = sbr.rel (0) target = $region5
    $region4: #{tpu_custom_call.1} parent=1 // pred_region
      %16 = vsyncadd [#allocation4], 0
      %s17 = sshll.u32 %s0, 4
      %s18 = int_to_ptr.hbm [resolvable:$true] %s17
      %s19 = sshll.u32 [#allocation3], 4
      %s20 = int_to_ptr.vmem [resolvable:$true] %s19
      %25 = dma.hbm_to_vmem [thread:$0]  %s18, 256, %s20, [#allocation4], 128, 128, 8
    $region5: #{tpu_custom_call.1} parent=1 // pred_fallthru
      _
    // Predicated region
    $region6: #{tpu_custom_call.1} parent=1 // pred_check
      _
    $region7: #{tpu_custom_call.1} parent=1 // pred_check_branch
      %27 = sbr.rel (0) target = $region9
    $region8: #{tpu_custom_call.1} parent=1 // pred_region
      %29 = vsyncadd [#allocation7], 0
      %s31 = sshll.u32 %s1, 4
      %s32 = int_to_ptr.hbm [resolvable:$true] %s31
      %s33 = sshll.u32 [#allocation6], 4
      %s34 = int_to_ptr.vmem [resolvable:$true] %s33
      %36 = dma.hbm_to_vmem [thread:$0]  %s32, 16, %s34, [#allocation7]
    $region9: #{tpu_custom_call.1} parent=1 // pred_fallthru
      _
    // Predicated region
    $region10: #{tpu_custom_call.1} parent=1 // pred_check
      _
    $region11: #{tpu_custom_call.1} parent=1 // pred_check_branch
      %38 = sbr.rel (0) target = $region13
    $region12: #{tpu_custom_call.1} parent=1 // pred_region
      _
    $region13: #{tpu_custom_call.1} parent=1 // pred_fallthru
      _
    // Predicated region
    $region14: #{tpu_custom_call.1} parent=1 // pred_check
      _
    $region15: #{tpu_custom_call.1} parent=1 // pred_check_branch
      %40 = sbr.rel (0) target = $region17
    $region16: #{tpu_custom_call.1} parent=1 // pred_region
      %42 = vsyncadd [#allocation7], 0
      %s43 = sshll.u32 %s3, 4
      %s44 = int_to_ptr.hbm [resolvable:$true] %s43
      %s45 = sshll.u32 [#allocation8], 4
      %s46 = int_to_ptr.vmem [resolvable:$true] %s45
      %51 = dma.hbm_to_vmem [thread:$0]  %s44, 2048, %s46, [#allocation7], 128, 128, 8
    $region17: #{tpu_custom_call.1} parent=1 // pred_fallthru
      _
    // Predicated region
    $region18: #{tpu_custom_call.1} parent=1 // pred_check
      _
    $region19: #{tpu_custom_call.1} parent=1 // pred_check_branch
      %53 = sbr.rel (0) target = $region21
    $region20: #{tpu_custom_call.1} parent=1 // pred_region
      _
    $region21: #{tpu_custom_call.1} parent=1 // pred_fallthru
      _
    // Predicated region
    $region22: #{tpu_custom_call.1} parent=1 // pred_check
      _
    $region23: #{tpu_custom_call.1} parent=1 // pred_check_branch
      %55 = sbr.rel (0) target = $region25
    $region24: #{tpu_custom_call.1} parent=1 // pred_region
      %57 = dma.done [#allocation4], 256
    $region25: #{tpu_custom_call.1} parent=1 // pred_fallthru
      _
    // Predicated region
    $region26: #{tpu_custom_call.1} parent=1 // pred_check
      _
    $region27: #{tpu_custom_call.1} parent=1 // pred_check_branch
      %59 = sbr.rel (0) target = $region29
    $region28: #{tpu_custom_call.1} parent=1 // pred_region
      %61 = dma.done [#allocation7], 16
    $region29: #{tpu_custom_call.1} parent=1 // pred_fallthru
      _
    // Predicated region
    $region30: #{tpu_custom_call.1} parent=1 // pred_check
      _
    $region31: #{tpu_custom_call.1} parent=1 // pred_check_branch
      %63 = sbr.rel (0) target = $region33
    $region32: #{tpu_custom_call.1} parent=1 // pred_region
      %65 = dma.done [#allocation7], 2048
    $region33: #{tpu_custom_call.1} parent=1 // pred_fallthru
      _
    %p66 = scmp.eq.s32.totalorder 0, 0
    // Predicated region
    $region34: #{tpu_custom_call.1} parent=1 // pred_check
      %p67 = pneg %p66
    $region35: #{tpu_custom_call.1} parent=1 // pred_check_branch
      %69 = sbr.rel (%p67) target = $region37
    $region36: #{tpu_custom_call.1} parent=1 // pred_region
      %v70 = vld [vmem:[#allocation3] sm:$0xff]
      %v71 = vld [vmem:[#allocation3 + $0x8] sm:$0xff]
      %72 = vadd.xlane.f32.xlu0 %v70
      %v73 = vpop.xlane.xlu0 %72
      %74 = vadd.xlane.f32.xlu0 %v71
      %v75 = vpop.xlane.xlu0 %74
      %v76 = vmul.f32 %v70, %v70
      %v77 = vmul.f32 %v71, %v71
      %78 = vadd.xlane.f32.xlu0 %v76
      %v79 = vpop.xlane.xlu0 %78
      %80 = vadd.xlane.f32.xlu0 %v77
      %v81 = vpop.xlane.xlu0 %80
      %v82 = vmul.f32 %v73, 0.0078125
      %v83 = vmul.f32 %v75, 0.0078125
      %v84 = vmul.f32 %v79, 0.0078125
      %v85 = vmul.f32 %v81, 0.0078125
      %v86 = vmul.f32 %v82, %v82
      %v87 = vmul.f32 %v83, %v83
      %v88 = vsub.f32 %v84, %v86
      %v89 = vsub.f32 %v85, %v87
      %v90 = vmax.f32 %v88, 0.0
      %v91 = vmax.f32 %v89, 0.0
      %v92 = vadd.f32 %v90, 1e-05
      %v93 = vadd.f32 %v91, 1e-05
      %v94 = vrsqrt.pop %v92
      %v95 = vmul.f32 %v94, %v92
      %v96 = vmul.f32 %v95, %v94
      %v97 = vmul.f32 0.5, %v96
      %v98 = vsub.f32 1.5, %v97
      %v99 = vmul.f32 %v94, %v98
      %vm100 = vweird.f32 %v92
      %vm101 = vweird.f32 %v94
      %vm102 = vmor %vm100, %vm101
      %v103 = vsel %vm102, %v94, %v99
      %v104 = vrsqrt.pop %v93
      %v105 = vmul.f32 %v104, %v93
      %v106 = vmul.f32 %v105, %v104
      %v107 = vmul.f32 0.5, %v106
      %v108 = vsub.f32 1.5, %v107
      %v109 = vmul.f32 %v104, %v108
      %vm110 = vweird.f32 %v93
      %vm111 = vweird.f32 %v104
      %vm112 = vmor %vm110, %vm111
      %v113 = vsel %vm112, %v104, %v109
      %v114 = vsub.f32 %v70, %v82
      %v115 = vsub.f32 %v71, %v83
      %v116 = vmul.f32 %v114, %v103
      %v117 = vmul.f32 %v115, %v113
      %v118 = vld [vmem:[#allocation6] sm:$0x1]
      %v120 = vperm.slane %v118, 0
      %v122 = vmul.f32 %v116, %v120
      %v123 = vmul.f32 %v117, %v120
      %v124 = vld [vmem:[%s2] sm:$0x1]
      %v126 = vperm.slane %v124, 0
      %v128 = vadd.f32 %v122, %v126
      %v129 = vadd.f32 %v123, %v126
      %130 = vst [vmem:[#allocation2] sm:$0xff] %v128
      %131 = vst [vmem:[#allocation2 + $0x8] sm:$0xff] %v129
    $region37: #{tpu_custom_call.1} parent=1 // pred_fallthru
      _
    %v132 = vld [vmem:[#allocation2] sm:$0xff]
    %v133 = vld [vmem:[#allocation2 + $0x8] sm:$0xff]
    %v134 = vld [vmem:[#allocation8] sm:$0xff]
    %v135 = vld [vmem:[#allocation8 + $0x8] sm:$0xff]
    %v136 = vld [vmem:[#allocation8 + $0x10] sm:$0xff]
    %v137 = vld [vmem:[#allocation8 + $0x18] sm:$0xff]
    %v138 = vld [vmem:[#allocation8 + $0x20] sm:$0xff]
    %v139 = vld [vmem:[#allocation8 + $0x28] sm:$0xff]
    %v140 = vld [vmem:[#allocation8 + $0x30] sm:$0xff]
    %v141 = vld [vmem:[#allocation8 + $0x38] sm:$0xff]
    %v142 = vld [vmem:[#allocation8 + $0x40] sm:$0xff]
    %v143 = vld [vmem:[#allocation8 + $0x48] sm:$0xff]
    %v144 = vld [vmem:[#allocation8 + $0x50] sm:$0xff]
    %v145 = vld [vmem:[#allocation8 + $0x58] sm:$0xff]
    %v146 = vld [vmem:[#allocation8 + $0x60] sm:$0xff]
    %v147 = vld [vmem:[#allocation8 + $0x68] sm:$0xff]
    %v148 = vld [vmem:[#allocation8 + $0x70] sm:$0xff]
    %v149 = vld [vmem:[#allocation8 + $0x78] sm:$0xff]
    %v150 = vld [vmem:[%s4] sm:$0x1]
    %v152 = vperm.slane %v150, 0
    %154 = vmatpush.msra.mxu0 %v149
    %155 = vmatpush.msra.mxu0 %v148
    %156 = vmatpush.msra.mxu0 %v147
    %157 = vmatpush.msra.mxu0 %v146
    %158 = vmatpush.msra.mxu0 %v145
    %159 = vmatpush.msra.mxu0 %v144
    %160 = vmatpush.msra.mxu0 %v143
    %161 = vmatpush.msra.mxu0 %v142
    %162 = vmatpush.msra.mxu0 %v141
    %163 = vmatpush.msra.mxu0 %v140
    %164 = vmatpush.msra.mxu0 %v139
    %165 = vmatpush.msra.mxu0 %v138
    %166 = vmatpush.msra.mxu0 %v137
    %167 = vmatpush.msra.mxu0 %v136
    %168 = vmatpush.msra.mxu0 %v135
    %169 = vmatpush.msra.mxu0 %v134
    %170 = vmatmul.f32.gmra.mxu0 %v132
    %v171 = vpop.f32.mrf.mxu0
    %v172 = vadd.f32 %v152, %v171
    %173 = vmatmul.f32.gmra.mxu0 %v133
    %v174 = vpop.f32.mrf.mxu0
    %v175 = vadd.f32 %v152, %v174
    %176 = vdwg.mxu0
    %177 = vst [vmem:[#allocation9] sm:$0xff] %v172
    %178 = vst [vmem:[#allocation9 + $0x8] sm:$0xff] %v175
    // Predicated region
    $region38: #{tpu_custom_call.1} parent=1 // pred_check
      _
    $region39: #{tpu_custom_call.1} parent=1 // pred_check_branch
      %180 = sbr.rel (0) target = $region41
    $region40: #{tpu_custom_call.1} parent=1 // pred_region
      %182 = vsyncadd [#allocation5], 0
      %s183 = sshll.u32 [#allocation9], 4
      %s184 = int_to_ptr.vmem [resolvable:$true] %s183
      %s185 = sshll.u32 %s5, 4
      %s186 = int_to_ptr.hbm [resolvable:$true] %s185
      %191 = dma.vmem_to_hbm [thread:$0]  %s184, 256, %s186, [#allocation5], 128, 128, 8
    $region41: #{tpu_custom_call.1} parent=1 // pred_fallthru
      _
    // Predicated region
    $region42: #{tpu_custom_call.1} parent=1 // pred_check
      _
    $region43: #{tpu_custom_call.1} parent=1 // pred_check_branch
      %193 = sbr.rel (0) target = $region45
    $region44: #{tpu_custom_call.1} parent=1 // pred_region
      %195 = dma.done [#allocation5], 256
    $region45: #{tpu_custom_call.1} parent=1 // pred_fallthru
      _
    %196 = vsyncpa [#allocation4], 1
    %197 = vsyncpa [#allocation7], 1
    %198 = vsyncpa [#allocation5], 1

</llo_original>
